<compile_context>
chip_gen: v7x
topology: tpu7x:2x2x1
jax: 0.10.0
libtpu: 0.0.40
codegen_flags: <defaults>
</compile_context>

<pallas_src>
import jax
import jax.numpy as jnp
from jax.experimental import pallas as pl
from jax.experimental.pallas import tpu as pltpu


def _round_up(v, m):
    return (v + m - 1) // m * m


def _largest_tile(total, step, cap):
    """Largest multiple of `step` that divides `total` and is <= cap."""
    best = step
    d = step
    while d <= min(total, cap):
        if total % d == 0:
            best = d
        d += step
    return best


def patch_embed_kernel(patches_ref, w_ref, pos_ref, o_ref):
    # patches_ref: (TM, K_pad)  bf16   im2col'd patch pixels (row 0 per batch = 0)
    # w_ref:       (K_pad, TN)  bf16   conv weight, reshaped/transposed
    # pos_ref:     (TM, TN)     f32    positions + bias (row 0 = cls + pos[0])
    # o_ref:       (TM, TN)     f32
    acc = jnp.dot(patches_ref[...], w_ref[...],
                  preferred_element_type=jnp.float32)
    o_ref[...] = (acc + pos_ref[...]).astype(o_ref.dtype)


def patch_embedding(x, conv_w, conv_b, cls_token, positions, patch_size):
    """ViT patch embedding. x: [B, C, H, W] f32 -> [B, N+1, E] f32."""
    B, C, H, W = x.shape
    P = patch_size
    Hp, Wp = H // P, W // P
    N = Hp * Wp
    E = conv_w.shape[0]
    K = C * P * P
    N1 = N + 1  # cls token + patches

    # Padded sizes for lane/sublane-dense tiles.
    K_pad = _round_up(K, 128)
    E_pad = _round_up(E, 128)
    N1_pad = _round_up(N1, 8)

    # --- im2col (pure layout, no FLOPs). Cast to bf16 first so the
    # materialized buffer is half the bytes.  A leading zero row per batch is
    # inserted so the matmul contributes exactly 0 to the cls-token row.
    # TODO(synk): fuse this rearrangement into the kernel (grid over (B, Hp),
    # contiguous (C, P, W) blocks) to avoid the extra HBM round-trip of x.
    patches = x.astype(jnp.bfloat16).reshape(B, C, Hp, P, Wp, P)
    patches = patches.transpose(0, 2, 4, 1, 3, 5).reshape(B, N, K)
    patches = jnp.pad(patches, ((0, 0), (1, N1_pad - N1), (0, K_pad - K)))
    patches = patches.reshape(B * N1_pad, K_pad)

    # Conv weight (E, C, P, P) -> (K, E), bf16, zero-padded. In a real model
    # this transpose is hoisted out of the per-call path (done once at init).
    w = conv_w.reshape(E, K).T.astype(jnp.bfloat16)
    w = jnp.pad(w, ((0, K_pad - K), (0, E_pad - E)))

    # Pre-fuse per-row additive terms into one f32 table (one batch's worth,
    # broadcast across batches via the index_map):
    #   row 0      : cls_token + positions[0]      (matmul row is all zeros)
    #   rows 1..N  : positions[1:] + conv bias
    pos2d = positions.reshape(N1, E)
    bias_pos = jnp.concatenate(
        [cls_token.reshape(1, E) + pos2d[0:1],
         pos2d[1:] + conv_b.reshape(1, E)],
        axis=0,
    )
    bias_pos = jnp.pad(bias_pos, ((0, N1_pad - N1), (0, E_pad - E)))

    # --- tiling: fold batch into M.  TM divides N1_pad so an M tile never
    # straddles a batch boundary (bias/position rows then index cleanly).
    M_total = B * N1_pad
    TM = _largest_tile(N1_pad, 8, 512)
    TN = _largest_tile(E_pad, 128, 512)
    m_tiles = M_total // TM
    e_tiles = E_pad // TN
    blocks_per_batch = N1_pad // TM

    if blocks_per_batch == 1:
        pos_index_map = lambda mi, ei: (0, ei)
    else:
        pos_index_map = lambda mi, ei: (mi % blocks_per_batch, ei)

    out_flat = pl.pallas_call(
        patch_embed_kernel,
        out_shape=jax.ShapeDtypeStruct((M_total, E_pad), jnp.float32),
        grid_spec=pltpu.PrefetchScalarGridSpec(
            num_scalar_prefetch=0,
            grid=(m_tiles, e_tiles),
            in_specs=[
                pl.BlockSpec((TM, K_pad), lambda mi, ei: (mi, 0)),   # patches
                pl.BlockSpec((K_pad, TN), lambda mi, ei: (0, ei)),   # weight
                pl.BlockSpec((TM, TN), pos_index_map),               # bias+pos
            ],
            out_specs=pl.BlockSpec((TM, TN), lambda mi, ei: (mi, ei)),
        ),
        compiler_params=pltpu.CompilerParams(
            dimension_semantics=("parallel", "parallel"),
        ),
    )(patches, w, bias_pos)

    # Strip zero padding only (cls row already fused in-kernel).
    out = out_flat.reshape(B, N1_pad, E_pad)
    if N1_pad != N1 or E_pad != E:
        out = out[:, :N1, :E]
    return out


def _reference(x, conv_w, conv_b, cls_token, positions, patch_size):
    """Plain-JAX f32 reference mirroring the PyTorch forward."""
    B, C, H, W = x.shape
    P = patch_size
    Hp, Wp = H // P, W // P
    N = Hp * Wp
    E = conv_w.shape[0]
    patches = x.reshape(B, C, Hp, P, Wp, P).transpose(0, 2, 4, 1, 3, 5)
    patches = patches.reshape(B, N, C * P * P)
    proj = jnp.einsum("bnk,ek->bne", patches, conv_w.reshape(E, -1)) + conv_b
    cls = jnp.broadcast_to(cls_token.reshape(1, 1, E), (B, 1, E))
    out = jnp.concatenate([cls, proj], axis=1)
    return out + positions.reshape(1, N + 1, E)


if __name__ == "__main__":
    # Small shapes consistent with the module's structure.
    B, C, H, W = 2, 4, 16, 16
    patch_size = 4
    emb_size = 32
    img_size = H
    n_patches = (img_size // patch_size) ** 2  # 16

    key = jax.random.PRNGKey(0)
    kx, kw, kb, kc, kp = jax.random.split(key, 5)

    x = jax.random.normal(kx, (B, C, H, W), dtype=jnp.float32)
    conv_w = jax.random.normal(
        kw, (emb_size, C, patch_size, patch_size), dtype=jnp.float32
    ) * 0.05
    conv_b = jax.random.normal(kb, (emb_size,), dtype=jnp.float32) * 0.05
    cls_token = jax.random.normal(kc, (1, 1, emb_size), dtype=jnp.float32)
    positions = jax.random.normal(
        kp, (n_patches + 1, emb_size), dtype=jnp.float32
    )

    out = patch_embedding(x, conv_w, conv_b, cls_token, positions, patch_size)
    out = jax.block_until_ready(out)

    ref = _reference(x, conv_w, conv_b, cls_token, positions, patch_size)
    assert out.shape == (B, n_patches + 1, emb_size), out.shape
    # bf16 inputs with f32 accumulation -> looser tolerance vs f32 reference.
    assert jnp.allclose(out, ref, atol=2e-2, rtol=2e-2), "mismatch vs reference"

    print("KERNEL_OK")
</pallas_src>

<mosaic_0001>
module attributes {stable_mosaic.version = 11 : i64} {
  func.func @patch_embed_kernel(%arg0: i32, %arg1: i32, %arg2: memref<24x128xbf16, #tpu.memory_space<vmem>>, %arg3: memref<128x128xbf16, #tpu.memory_space<vmem>>, %arg4: memref<24x128xf32, #tpu.memory_space<vmem>>, %arg5: memref<24x128xf32, #tpu.memory_space<vmem>>) attributes {dimension_semantics = [#tpu.dimension_semantics<parallel>, #tpu.dimension_semantics<parallel>], iteration_bounds = array<i64: 2, 1>, scalar_prefetch = 0 : i64, scratch_operands = 0 : i64, tpu.core_type = #tpu.core_type<tc>, window_params = [{transform_indices = @transform_0, window_bounds = array<i64: 24, 128>}, {transform_indices = @transform_1, window_bounds = array<i64: 128, 128>}, {transform_indices = @transform_2, window_bounds = array<i64: 24, 128>}, {transform_indices = @transform_3, window_bounds = array<i64: 24, 128>}]} {
    %c0 = arith.constant 0 : index
    %c0_0 = arith.constant 0 : index
    %0 = vector.load %arg2[%c0, %c0_0] : memref<24x128xbf16, #tpu.memory_space<vmem>>, vector<24x128xbf16>
    %c0_1 = arith.constant 0 : index
    %c0_2 = arith.constant 0 : index
    %1 = vector.load %arg3[%c0_1, %c0_2] : memref<128x128xbf16, #tpu.memory_space<vmem>>, vector<128x128xbf16>
    %cst = arith.constant dense<0.000000e+00> : vector<24x128xf32>
    %2 = tpu.matmul %0, %1, %cst {dimension_numbers = #tpu.dot_dimension_numbers<[1], [0], [0], [1], [0, 0, 1, 1], [], []>} : vector<24x128xbf16>, vector<128x128xbf16>, vector<24x128xf32> -> vector<24x128xf32>
    %c0_3 = arith.constant 0 : index
    %c0_4 = arith.constant 0 : index
    %3 = vector.load %arg4[%c0_3, %c0_4] : memref<24x128xf32, #tpu.memory_space<vmem>>, vector<24x128xf32>
    %4 = arith.addf %2, %3 : vector<24x128xf32>
    %c0_5 = arith.constant 0 : index
    %c0_6 = arith.constant 0 : index
    %5 = vector.load %arg5[%c0_5, %c0_6] : memref<24x128xf32, #tpu.memory_space<vmem>>, vector<24x128xf32>
    tpu.vector_store %arg5[%c0_5, %c0_6], %4 {strides = array<i32>} : memref<24x128xf32, #tpu.memory_space<vmem>>, vector<24x128xf32>,
    return
  }
  func.func @transform_0(%arg0: i32, %arg1: i32) -> (i32, i32) {
    %c0_i32 = arith.constant 0 : i32
    %c0_i32_0 = arith.constant 0 : i32
    return %arg0, %c0_i32 : i32, i32
  }
  func.func @transform_1(%arg0: i32, %arg1: i32) -> (i32, i32) {
    %c0_i32 = arith.constant 0 : i32
    %c0_i32_0 = arith.constant 0 : i32
    return %c0_i32, %arg1 : i32, i32
  }
  func.func @transform_2(%arg0: i32, %arg1: i32) -> (i32, i32) {
    %c0_i32 = arith.constant 0 : i32
    %c0_i32_0 = arith.constant 0 : i32
    return %c0_i32, %arg1 : i32, i32
  }
  func.func @transform_3(%arg0: i32, %arg1: i32) -> (i32, i32) {
    %c0_i32 = arith.constant 0 : i32
    return %arg0, %arg1 : i32, i32
  }
}

</mosaic_0001>

<llo_original>
// kernel: tpu_custom_call.1
$region0: #{tpu_custom_call.1}
  #allocation0 [shape = 'u32[]', space=smem, size = 0x4, offset = 0x4, fixed_abs, tag = 'smem constant byte address 0x4 - core index']
  #allocation1 [shape = 'u32[144,128]{1,0:T(1,128)}', space=vmem, size = 0x12000, scoped, tag = 'internal scratch']
  %s0 = inlined_call_operand.hbm [shape: bf16[48,128], index: 0, kind: input, shape index: {}]
  %s1 = inlined_call_operand.hbm [shape: bf16[128,128], index: 1, kind: input, shape index: {}]
  %s2 = inlined_call_operand.hbm [shape: f32[24,128], index: 2, kind: input, shape index: {}]
  %s3 = inlined_call_operand.hbm [shape: f32[48,128], index: 3, kind: output, shape index: {}]
  %s4 = sld [smem:[#allocation0]]
  $region57: #{tpu_custom_call.1} parent=0
    _
  %s6 = ssub.s32 1, %s4
  %s7 = scalar_select 0, %s6, %s4
  $region1: #{tpu_custom_call.1} parent=0
    #allocation2 [shape = 'u8[12288]{0}', space=vmem, size = 0x3000, scoped, tag = 'input window, operand 0']
    #allocation3 [shape = 's32[2]{0}', space=sflag, size = 0x8, scoped, tag = 'scoped memory for tpu_custom_call.1']
    #allocation4 [shape = 's32[2]{0}', space=sflag, size = 0x8, scoped, tag = 'scoped memory for tpu_custom_call.1']
    #allocation5 [shape = 'u8[32768]{0}', space=vmem, size = 0x8000, scoped, tag = 'input window, operand 1, single buffered']
    #allocation6 [shape = 's32[1]{0}', space=sflag, size = 0x4, scoped, tag = 'scoped memory for tpu_custom_call.1']
    #allocation7 [shape = 'u8[12288]{0}', space=vmem, size = 0x3000, scoped, tag = 'input window, operand 2, single buffered']
    #allocation8 [shape = 'u8[24576]{0}', space=vmem, size = 0x6000, scoped, tag = 'output window, operand 0']
    %8 = vsyncpa [#allocation3], 0
    %s9 = scalar_lea.sflag [#allocation3], 1
    %10 = vsyncpa %s9, 0
    %11 = vsyncpa [#allocation6], 0
    %12 = vsyncpa [#allocation4], 0
    %s13 = scalar_lea.sflag [#allocation4], 1
    %14 = vsyncpa %s13, 0
    loop: start=0, step=1, limit=4
    $region2: #{tpu_custom_call.1} parent=1 // loop_pre_header
      _
    $region3: #{tpu_custom_call.1} parent=1 // loop_header
      %s16 = sphi 0, %s20
      %p17 = scmp.ge.s32.totalorder %s16, 4
      %s23 = sphi 0, %s35
      %s24 = sphi 0, %s31
      %s25 = sphi 0, %s23
      %s26 = sphi 0, %s24
      %s27 = sphi 0, %s25
      %s28 = sphi 0, %s26
      %s38 = sphi 0, %s40
      %s41 = sphi 0, %s38
      %s42 = sphi 0, %s41
      %s58 = sphi 0, %s42
      %s64 = sphi 0, %s66
      %s67 = sphi 0, %s64
      %s68 = sphi 0, %s67
      %s84 = sphi 0, %s68
      %s90 = sphi 0, %s92
      %s93 = sphi 0, %s90
      %s94 = sphi 0, %s93
      %s110 = sphi 0, %s94
      %s118 = sphi 0, %s120
      %s121 = sphi 0, %s118
      %s122 = sphi 0, %s121
      %s138 = sphi 0, %s122
    $region4: #{tpu_custom_call.1} parent=1 // loop_header_branch
      %19 = sbr.rel (%p17) target = $region8
    $region5: #{tpu_custom_call.1} parent=1 // loop_body
      %s21 = ssub.s32 %s16, 1
      %s22 = ssub.s32 %s16, 2
      %s29 = sadd.s32 1, %s24
      %p30 = scmp.ge.s32.totalorder %s29, 1
      %s31 = scalar_select %p30, 0, %s29
      %s32 = sadd.s32 1, %s23
      %s33 = scalar_select %p30, %s32, %s23
      %p34 = scmp.ge.s32.totalorder %s33, 2
      %s35 = scalar_select %p34, 0, %s33
      %s36 = ssub.s32 %s23, %s35
      %p37 = scmp.eq.s32.totalorder %s36, 0
      %s39 = sadd.s32 %s38, 1
      %s40 = scalar_select %p37, %s38, %s39
      %p43 = pneg %p37
      %p44 = scmp.eq.s32.totalorder %s16, 1
      %p45 = por %p43, %p44
      %p46 = scmp.ne.s32.totalorder %s38, %s41
      %p47 = scmp.eq.s32.totalorder %s16, 0
      %p48 = por %p46, %p47
      %p49 = scmp.ne.s32.totalorder %s38, %s41
      %p50 = scmp.eq.s32.totalorder %s21, 1
      %p51 = por %p49, %p50
      %p52 = scmp.ne.s32.totalorder %s41, %s42
      %p53 = scmp.eq.s32.totalorder %s21, 0
      %p54 = por %p52, %p53
      %p55 = scmp.ne.s32.totalorder %s41, %s42
      %p56 = scmp.eq.s32.totalorder %s22, 1
      %p57 = por %p55, %p56
      %p59 = scmp.ne.s32.totalorder %s42, %s58
      %p60 = scmp.eq.s32.totalorder %s22, 0
      %p61 = por %p59, %p60
      %s62 = ssub.s32 %s24, %s31
      %p63 = scmp.eq.s32.totalorder %s62, 0
      %s65 = sadd.s32 %s64, 1
      %s66 = scalar_select %p63, %s64, %s65
      %p69 = pneg %p63
      %p70 = scmp.eq.s32.totalorder %s16, 1
      %p71 = por %p69, %p70
      %p72 = scmp.ne.s32.totalorder %s64, %s67
      %p73 = scmp.eq.s32.totalorder %s16, 0
      %p74 = por %p72, %p73
      %p75 = scmp.ne.s32.totalorder %s64, %s67
      %p76 = scmp.eq.s32.totalorder %s21, 1
      %p77 = por %p75, %p76
      %p78 = scmp.ne.s32.totalorder %s67, %s68
      %p79 = scmp.eq.s32.totalorder %s21, 0
      %p80 = por %p78, %p79
      %p81 = scmp.ne.s32.totalorder %s67, %s68
      %p82 = scmp.eq.s32.totalorder %s22, 1
      %p83 = por %p81, %p82
      %p85 = scmp.ne.s32.totalorder %s68, %s84
      %p86 = scmp.eq.s32.totalorder %s22, 0
      %p87 = por %p85, %p86
      %s88 = ssub.s32 %s24, %s31
      %p89 = scmp.eq.s32.totalorder %s88, 0
      %s91 = sadd.s32 %s90, 1
      %s92 = scalar_select %p89, %s90, %s91
      %p95 = pneg %p89
      %p96 = scmp.eq.s32.totalorder %s16, 1
      %p97 = por %p95, %p96
      %p98 = scmp.ne.s32.totalorder %s90, %s93
      %p99 = scmp.eq.s32.totalorder %s16, 0
      %p100 = por %p98, %p99
      %p101 = scmp.ne.s32.totalorder %s90, %s93
      %p102 = scmp.eq.s32.totalorder %s21, 1
      %p103 = por %p101, %p102
      %p104 = scmp.ne.s32.totalorder %s93, %s94
      %p105 = scmp.eq.s32.totalorder %s21, 0
      %p106 = por %p104, %p105
      %p107 = scmp.ne.s32.totalorder %s93, %s94
      %p108 = scmp.eq.s32.totalorder %s22, 1
      %p109 = por %p107, %p108
      %p111 = scmp.ne.s32.totalorder %s94, %s110
      %p112 = scmp.eq.s32.totalorder %s22, 0
      %p113 = por %p111, %p112
      %s114 = ssub.s32 %s23, %s35
      %s115 = ssub.s32 %s24, %s31
      %s116 = sor.u32 %s114, %s115
      %p117 = scmp.eq.s32.totalorder %s116, 0
      %s119 = sadd.s32 %s118, 1
      %s120 = scalar_select %p117, %s118, %s119
      %p123 = pneg %p117
      %p124 = scmp.eq.s32.totalorder %s16, 1
      %p125 = por %p123, %p124
      %p126 = scmp.ne.s32.totalorder %s118, %s121
      %p127 = scmp.eq.s32.totalorder %s16, 0
      %p128 = por %p126, %p127
      %p129 = scmp.ne.s32.totalorder %s118, %s121
      %p130 = scmp.eq.s32.totalorder %s21, 1
      %p131 = por %p129, %p130
      %p132 = scmp.ne.s32.totalorder %s121, %s122
      %p133 = scmp.eq.s32.totalorder %s21, 0
      %p134 = por %p132, %p133
      %p135 = scmp.ne.s32.totalorder %s121, %s122
      %p136 = scmp.eq.s32.totalorder %s22, 1
      %p137 = por %p135, %p136
      %p139 = scmp.ne.s32.totalorder %s122, %s138
      %p140 = scmp.eq.s32.totalorder %s22, 0
      %p141 = por %p139, %p140
      %p142 = scmp.le.s32.totalorder 1, %s16
      %p143 = scmp.lt.s32.totalorder %s16, 3
      %p144 = pnand %p142, %p143
      %p145 = pneg %p144
      // Predicated region
      $region9: #{tpu_custom_call.1} parent=5 // pred_check
        _
      $region10: #{tpu_custom_call.1} parent=5 // pred_check_branch
        %147 = sbr.rel (%p144) target = $region12
      $region11: #{tpu_custom_call.1} parent=5 // pred_region
        %s148 = ssub.s32 %s16, 1
        // Predicated region
        $region13: #{tpu_custom_call.1} parent=11 // pred_check
          %p149 = pneg %p80
        $region14: #{tpu_custom_call.1} parent=11 // pred_check_branch
          %151 = sbr.rel (%p149) target = $region16
        $region15: #{tpu_custom_call.1} parent=11 // pred_region
          %s153 = ssub.s32 1024, 1024
          %154 = vsyncadd [#allocation6], %s153
          %s155 = smul.addr %s26, 64
          %s156 = scalar_lea.hbm %s1, %s155
          %s157 = sshll.u32 [#allocation5], 4
          %s158 = int_to_ptr.vmem [resolvable:$true] %s157
          %163 = dma.hbm_to_vmem [thread:$0]  %s156, 1024, %s158, [#allocation6], 64, 64, 4
        $region16: #{tpu_custom_call.1} parent=11 // pred_fallthru
          _
        // Predicated region
        $region17: #{tpu_custom_call.1} parent=11 // pred_check
          %p164 = pneg %p106
        $region18: #{tpu_custom_call.1} parent=11 // pred_check_branch
          %166 = sbr.rel (%p164) target = $region20
        $region19: #{tpu_custom_call.1} parent=11 // pred_region
          %s168 = ssub.s32 384, 384
          %169 = vsyncadd [#allocation6], %s168
          %s170 = smul.addr %s26, 128
          %s171 = scalar_lea.hbm %s2, %s170
          %s172 = sshll.u32 [#allocation7], 4
          %s173 = int_to_ptr.vmem [resolvable:$true] %s172
          %178 = dma.hbm_to_vmem [thread:$0]  %s171, 384, %s173, [#allocation6], 128, 128, 8
        $region20: #{tpu_custom_call.1} parent=11 // pred_fallthru
          _
      $region12: #{tpu_custom_call.1} parent=5 // pred_fallthru
        _
      %p179 = scmp.lt.s32.totalorder %s16, 2
      // Predicated region
      $region21: #{tpu_custom_call.1} parent=5 // pred_check
        %p180 = pneg %p179
      $region22: #{tpu_custom_call.1} parent=5 // pred_check_branch
        %182 = sbr.rel (%p180) target = $region24
      $region23: #{tpu_custom_call.1} parent=5 // pred_region
        // Predicated region
        $region25: #{tpu_custom_call.1} parent=23 // pred_check
          %p183 = pneg %p48
        $region26: #{tpu_custom_call.1} parent=23 // pred_check_branch
          %185 = sbr.rel (%p183) target = $region28
        $region27: #{tpu_custom_call.1} parent=23 // pred_region
          %s186 = sand.u32 %s38, 1
          %s187 = scalar_lea.sflag [#allocation3], %s186
          %s188 = sand.u32 %s38, 1
          %s189 = smul.addr %s188, 12
          %s190 = scalar_lea.vmem [#allocation2], %s189
          %s191 = smul.u32 3, %s23
          %s193 = ssub.s32 192, 192
          %194 = vsyncadd %s187, %s193
          %s195 = smul.addr %s191, 64
          %s196 = scalar_lea.hbm %s0, %s195
          %s197 = sshll.u32 %s190, 4
          %s198 = int_to_ptr.vmem [resolvable:$true] %s197
          %203 = dma.hbm_to_vmem [thread:$0]  %s196, 192, %s198, %s187, 64, 64, 4
        $region28: #{tpu_custom_call.1} parent=23 // pred_fallthru
          _
      $region24: #{tpu_custom_call.1} parent=5 // pred_fallthru
        _
      %p204 = scmp.le.s32.totalorder 1, %s16
      %p205 = scmp.lt.s32.totalorder %s16, 3
      %p206 = pnand %p204, %p205
      %p207 = pneg %p206
      // Predicated region
      $region29: #{tpu_custom_call.1} parent=5 // pred_check
        _
      $region30: #{tpu_custom_call.1} parent=5 // pred_check_branch
        %209 = sbr.rel (%p206) target = $region32
      $region31: #{tpu_custom_call.1} parent=5 // pred_region
        %s210 = ssub.s32 %s16, 1
        %s211 = sand.u32 %s41, 1
        %s212 = scalar_lea.sflag [#allocation3], %s211
        %s213 = sand.u32 %s41, 1
        %s214 = smul.addr %s213, 12
        %s215 = scalar_lea.vmem [#allocation2], %s214
        // Predicated region
        $region33: #{tpu_custom_call.1} parent=31 // pred_check
          %p216 = pneg %p54
        $region34: #{tpu_custom_call.1} parent=31 // pred_check_branch
          %218 = sbr.rel (%p216) target = $region36
        $region35: #{tpu_custom_call.1} parent=31 // pred_region
          %219 = dma.done %s212, 192
        $region36: #{tpu_custom_call.1} parent=31 // pred_fallthru
          _
        // Predicated region
        $region37: #{tpu_custom_call.1} parent=31 // pred_check
          %p220 = pneg %p80
        $region38: #{tpu_custom_call.1} parent=31 // pred_check_branch
          %222 = sbr.rel (%p220) target = $region40
        $region39: #{tpu_custom_call.1} parent=31 // pred_region
          %223 = dma.done [#allocation6], 1024
        $region40: #{tpu_custom_call.1} parent=31 // pred_fallthru
          _
        // Predicated region
        $region41: #{tpu_custom_call.1} parent=31 // pred_check
          %p224 = pneg %p106
        $region42: #{tpu_custom_call.1} parent=31 // pred_check_branch
          %226 = sbr.rel (%p224) target = $region44
        $region43: #{tpu_custom_call.1} parent=31 // pred_region
          %227 = dma.done [#allocation6], 384
        $region44: #{tpu_custom_call.1} parent=31 // pred_fallthru
          _
        %s228 = sand.u32 %s41, 1
        %s229 = scalar_lea.sflag [#allocation3], %s228
        %s230 = sand.u32 %s41, 1
        %s231 = smul.addr %s230, 12
        %s232 = scalar_lea.vmem [#allocation2], %s231
        %p233 = pneg %p54
        %p234 = pneg %p51
        %p235 = pneg %p80
        %p236 = pneg %p77
        %p237 = pneg %p106
        %p238 = pneg %p103
        %p239 = pneg %p134
        %p240 = pneg %p131
        %s241 = sand.u32 %s121, 1
        %s242 = scalar_lea.sflag [#allocation4], %s241
        %s243 = sand.u32 %s121, 1
        %s244 = smul.addr %s243, 24
        %s245 = scalar_lea.vmem [#allocation8], %s244
        %s246 = smul.u32 3, %s25
        %s247 = smul.u32 3, %s25
        %v249 = vld [vmem:[%s215] sm:$0xf]
        %v250 = vld [vmem:[%s215 + $0x4] sm:$0xf]
        %v251 = vld [vmem:[%s215 + $0x8] sm:$0xf]
        %v252 = vld [vmem:[#allocation5] sm:$0xf]
        %v253 = vld [vmem:[#allocation5 + $0x4] sm:$0xf]
        %v254 = vld [vmem:[#allocation5 + $0x8] sm:$0xf]
        %v255 = vld [vmem:[#allocation5 + $0xc] sm:$0xf]
        %v256 = vld [vmem:[#allocation5 + $0x10] sm:$0xf]
        %v257 = vld [vmem:[#allocation5 + $0x14] sm:$0xf]
        %v258 = vld [vmem:[#allocation5 + $0x18] sm:$0xf]
        %v259 = vld [vmem:[#allocation5 + $0x1c] sm:$0xf]
        %v260 = vld [vmem:[#allocation5 + $0x20] sm:$0xf]
        %v261 = vld [vmem:[#allocation5 + $0x24] sm:$0xf]
        %v262 = vld [vmem:[#allocation5 + $0x28] sm:$0xf]
        %v263 = vld [vmem:[#allocation5 + $0x2c] sm:$0xf]
        %v264 = vld [vmem:[#allocation5 + $0x30] sm:$0xf]
        %v265 = vld [vmem:[#allocation5 + $0x34] sm:$0xf]
        %v266 = vld [vmem:[#allocation5 + $0x38] sm:$0xf]
        %v267 = vld [vmem:[#allocation5 + $0x3c] sm:$0xf]
        %v268 = vld [vmem:[#allocation7] sm:$0xff]
        %v269 = vld [vmem:[#allocation7 + $0x8] sm:$0xff]
        %v270 = vld [vmem:[#allocation7 + $0x10] sm:$0xff]
        %v274 = vunpack.c.l.b16 %v249
        %v275 = vunpack.c.l.b16 %v250
        %v276 = vunpack.c.l.b16 %v251
        %v277 = vpack.c.b16 %v275, %v274
        %v278 = vpack.c.b16 %v276, %v276
        %v297 = vunpack.c.l.b16 %v252
        %v298 = vunpack.c.l.b16 %v253
        %v299 = vunpack.c.l.b16 %v254
        %v300 = vunpack.c.l.b16 %v255
        %v301 = vunpack.c.l.b16 %v256
        %v302 = vunpack.c.l.b16 %v257
        %v303 = vunpack.c.l.b16 %v258
        %v304 = vunpack.c.l.b16 %v259
        %v305 = vunpack.c.l.b16 %v260
        %v306 = vunpack.c.l.b16 %v261
        %v307 = vunpack.c.l.b16 %v262
        %v308 = vunpack.c.l.b16 %v263
        %v309 = vunpack.c.l.b16 %v264
        %v310 = vunpack.c.l.b16 %v265
        %v311 = vunpack.c.l.b16 %v266
        %v312 = vunpack.c.l.b16 %v267
        %v313 = vpack.c.b16 %v298, %v297
        %v314 = vpack.c.b16 %v300, %v299
        %v315 = vpack.c.b16 %v302, %v301
        %v316 = vpack.c.b16 %v304, %v303
        %v317 = vpack.c.b16 %v306, %v305
        %v318 = vpack.c.b16 %v308, %v307
        %v319 = vpack.c.b16 %v310, %v309
        %v320 = vpack.c.b16 %v312, %v311
        %329 = vmatprep.subr.bf16.mxu0 0
        %330 = vmatpush1.bf16.msra.mxu0 %v313
        %331 = vmatprep.subr.bf16.mxu0 0
        %332 = vmatpush1.bf16.msra.mxu0 %v314
        %333 = vmatprep.subr.bf16.mxu0 0
        %334 = vmatpush1.bf16.msra.mxu0 %v315
        %335 = vmatprep.subr.bf16.mxu0 0
        %336 = vmatpush1.bf16.msra.mxu0 %v316
        %337 = vmatprep.subr.bf16.mxu0 0
        %338 = vmatpush1.bf16.msra.mxu0 %v317
        %339 = vmatprep.subr.bf16.mxu0 0
        %340 = vmatpush1.bf16.msra.mxu0 %v318
        %341 = vmatprep.subr.bf16.mxu0 0
        %342 = vmatpush1.bf16.msra.mxu0 %v319
        %343 = vmatprep.subr.bf16.mxu0 0
        %344 = vmatpush1.bf16.msra.mxu0 %v320
        %345 = vmatprep.subr.bf16.mxu0 0
        %346 = vmatpush1.bf16.msra.mxu0 0
        %347 = vmatprep.subr.bf16.mxu0 0
        %348 = vmatpush1.bf16.msra.mxu0 0
        %349 = vmatprep.subr.bf16.mxu0 0
        %350 = vmatpush1.bf16.msra.mxu0 0
        %351 = vmatprep.subr.bf16.mxu0 0
        %352 = vmatpush1.bf16.msra.mxu0 0
        %353 = vmatprep.subr.bf16.mxu0 0
        %354 = vmatpush1.bf16.msra.mxu0 0
        %355 = vmatprep.subr.bf16.mxu0 0
        %356 = vmatpush1.bf16.msra.mxu0 0
        %357 = vmatprep.subr.bf16.mxu0 0
        %358 = vmatpush1.bf16.msra.mxu0 0
        %359 = vmatprep.subr.bf16.mxu0 0
        %360 = vmatpush1.bf16.msra.mxu0 0
        %361 = vmatprep.mubr.bf16.mxu0 0
        %362 = vmatmul.mubr.bf16.gmra.mrb[0].mxu0 %v277
        %v363 = vpop.f32.mrb[0].mxu0
        %v364 = vadd.f32 %v268, %v363
        %v365 = vpop.f32.mrb[0].mxu0
        %v366 = vpop.f32.mrb[0].mxu0
        %v367 = vadd.f32 %v269, %v366
        %v368 = vpop.f32.mrb[0].mxu0
        %369 = vmatprep.mubr.bf16.mxu0 0
        %370 = vmatmul.mubr.bf16.gmra.mrb[0].mxu0 %v278
        %v371 = vpop.f32.mrb[0].mxu0
        %v372 = vadd.f32 %v270, %v371
        %v373 = vpop.f32.mrb[0].mxu0
        %v374 = vpop.f32.mrb[0].mxu0
        %v375 = vpop.f32.mrb[0].mxu0
        %376 = vdwg.mxu0
        %377 = vst [vmem:[%s245] sm:$0xff] %v364
        %378 = vst [vmem:[%s245 + $0x8] sm:$0xff] %v367
        %379 = vst [vmem:[%s245 + $0x10] sm:$0xff] %v372
        %s380 = sand.u32 %s121, 1
        %s381 = scalar_lea.sflag [#allocation4], %s380
        %s382 = sand.u32 %s121, 1
        %s383 = smul.addr %s382, 24
        %s384 = scalar_lea.vmem [#allocation8], %s383
        // Predicated region
        $region45: #{tpu_custom_call.1} parent=31 // pred_check
          %p385 = pneg %p131
        $region46: #{tpu_custom_call.1} parent=31 // pred_check_branch
          %387 = sbr.rel (%p385) target = $region48
        $region47: #{tpu_custom_call.1} parent=31 // pred_region
          %s388 = smul.u32 3, %s25
          %s390 = ssub.s32 384, 384
          %391 = vsyncadd %s381, %s390
          %s392 = sadd.s32 %s26, %s388
          %s393 = smul.addr %s392, 128
          %s394 = scalar_lea.hbm %s3, %s393
          %s395 = sshll.u32 %s384, 4
          %s396 = int_to_ptr.vmem [resolvable:$true] %s395
          %401 = dma.vmem_to_hbm [thread:$0]  %s396, 384, %s394, %s381, 128, 128, 8
        $region48: #{tpu_custom_call.1} parent=31 // pred_fallthru
          _
      $region32: #{tpu_custom_call.1} parent=5 // pred_fallthru
        _
      %p402 = scmp.le.s32.totalorder 2, %s16
      // Predicated region
      $region49: #{tpu_custom_call.1} parent=5 // pred_check
        %p403 = pneg %p402
      $region50: #{tpu_custom_call.1} parent=5 // pred_check_branch
        %405 = sbr.rel (%p403) target = $region52
      $region51: #{tpu_custom_call.1} parent=5 // pred_region
        %s406 = ssub.s32 %s16, 2
        // Predicated region
        $region53: #{tpu_custom_call.1} parent=51 // pred_check
          %p407 = pneg %p137
        $region54: #{tpu_custom_call.1} parent=51 // pred_check_branch
          %409 = sbr.rel (%p407) target = $region56
        $region55: #{tpu_custom_call.1} parent=51 // pred_region
          %s410 = sand.u32 %s122, 1
          %s411 = scalar_lea.sflag [#allocation4], %s410
          %s412 = sand.u32 %s122, 1
          %s413 = smul.addr %s412, 24
          %s414 = scalar_lea.vmem [#allocation8], %s413
          %415 = dma.done %s411, 384
        $region56: #{tpu_custom_call.1} parent=51 // pred_fallthru
          _
      $region52: #{tpu_custom_call.1} parent=5 // pred_fallthru
        _
    $region6: #{tpu_custom_call.1} parent=1 // loop_footer
      %s20 = sadd.s32 1, %s16
    $region7: #{tpu_custom_call.1} parent=1 // loop_footer_branch
      %15 = sbr.rel target = $region3
    $region8: #{tpu_custom_call.1} parent=1 // loop_exit
      _
    %416 = vsyncpa [#allocation3], 1
    %s417 = scalar_lea.sflag [#allocation3], 1
    %418 = vsyncpa %s417, 1
    %419 = vsyncpa [#allocation6], 1
    %420 = vsyncpa [#allocation4], 1
    %s421 = scalar_lea.sflag [#allocation4], 1
    %422 = vsyncpa %s421, 1

</llo_original>
